<compile_context>
chip_gen: v5e
topology: v5e:2x2
jax: 0.10.0
libtpu: 0.0.40
codegen_flags: <defaults>
</compile_context>

<pallas_src>
import functools

import jax
import jax.numpy as jnp
from jax import lax
from jax.experimental import pallas as pl
from jax.experimental.pallas import tpu as pltpu


def _ntxent_kernel(zis_ref, zjs_hbm, loss_ref,
                   h2s_ref, colsum_ref, acc_ref, shift_ref, copy_sem,
                   *, temperature, alpha, norm, static_shift, batch, tile_m,
                   matmul_in_bf16):
    i = pl.program_id(0)
    n_steps = pl.num_programs(0)
    inv_t = jnp.float32(1.0 / temperature)

    # ---- one-time init (first row tile) -----------------------------------
    @pl.when(i == 0)
    def _init():
        # Single B x D copy of h2: DMA HBM -> VMEM scratch, normalize in place.
        cp = pltpu.make_async_copy(zjs_hbm, h2s_ref, copy_sem)
        cp.start()
        cp.wait()
        if norm:
            h2 = h2s_ref[...]
            # 1/max(||x||, 1e-12) == rsqrt(max(sum(x^2), 1e-24))
            s2 = lax.rsqrt(jnp.maximum(jnp.sum(h2 * h2, axis=1, keepdims=True),
                                       jnp.float32(1e-24)))
            h2s_ref[...] = h2 * s2
        colsum_ref[...] = jnp.zeros_like(colsum_ref)
        acc_ref[0] = jnp.float32(0.0)
        acc_ref[1] = jnp.float32(0.0)
        if not static_shift:
            shift_ref[0] = jnp.float32(-jnp.inf)

    # ---- per-tile work -----------------------------------------------------
    h1 = zis_ref[...].astype(jnp.float32)                       # (TM, D)
    if norm:
        s1 = lax.rsqrt(jnp.maximum(jnp.sum(h1 * h1, axis=1, keepdims=True),
                                   jnp.float32(1e-24))) * inv_t
    else:
        s1 = inv_t
    h1s = h1 * s1                                               # carries 1/T
    h2s = h2s_ref[...]                                          # (B, D)

    if matmul_in_bf16:
        a_mm = h1s.astype(jnp.bfloat16)
        b_mm = h2s.astype(jnp.bfloat16)
    else:
        a_mm, b_mm = h1s, h2s
    # logits_ab tile = h1s @ h2s.T  (NT contraction, native on the MXU)
    logits = lax.dot_general(
        a_mm, b_mm,
        dimension_numbers=(((1,), (1,)), ((), ())),
        preferred_element_type=jnp.float32)                     # (TM, B)

    # Positive-pair (diagonal) logits, extracted from the logits tile itself.
    row_start = i * tile_m
    rows = lax.broadcasted_iota(jnp.int32, (tile_m, batch), 0)
    cols = lax.broadcasted_iota(jnp.int32, (tile_m, batch), 1)
    diag_mask = cols == rows + row_start
    diag = jnp.sum(jnp.where(diag_mask, logits, jnp.float32(0.0)),
                   axis=1, keepdims=True)                       # (TM, 1)

    # Single shared shift per tile -> single exp pass feeds row AND column sums.
    if static_shift:
        shift = inv_t                     # norm=True: |logit| <= 1/T
    else:
        shift = jnp.max(logits)           # scalar tile max (dynamic fallback)
    e = jnp.exp(logits - shift)                                 # (TM, B)

    # loss_a contribution: row-wise logsumexp minus the diagonal
    row_sum = jnp.sum(e, axis=1, keepdims=True)                 # (TM, 1)
    acc_ref[0] += jnp.sum(shift + jnp.log(row_sum) - diag)
    acc_ref[1] += jnp.sum(diag)

    # loss_b: online column-wise sum of exp(logits_ab - shift)
    col_tile = jnp.sum(e, axis=0, keepdims=True)                # (1, B)
    if static_shift:
        colsum_ref[...] += col_tile
    else:
        old = shift_ref[0]
        new_m = jnp.maximum(old, shift)
        colsum_ref[...] = (colsum_ref[...] * jnp.exp(old - new_m)
                           + col_tile * jnp.exp(shift - new_m))
        shift_ref[0] = new_m

    # ---- finalize on the last row tile -------------------------------------
    @pl.when(i == n_steps - 1)
    def _finalize():
        inv_b = jnp.float32(1.0 / batch)
        if static_shift:
            fshift = inv_t
        else:
            fshift = shift_ref[0]
        col_lse_sum = jnp.sum(fshift + jnp.log(colsum_ref[...]))
        loss_a = acc_ref[0] * inv_b
        loss_b = (col_lse_sum - acc_ref[1]) * inv_b
        loss_ref[0, 0] = (jnp.float32(alpha) * loss_a
                          + jnp.float32(1.0 - alpha) * loss_b)


def _pick_tile(b, d, budget_bytes=36 * 1024 * 1024):
    """Largest sublane-friendly row tile dividing B whose footprint fits budget."""
    divisors = [c for c in (512, 256, 128, 64, 32, 16, 8) if b % c == 0]
    if not divisors:
        return b  # tiny / odd batch: single full-array block
    resident = b * d * 4 + b * 4              # h2 scratch + column stats
    for c in divisors:                        # descending
        # h1 double buffer + ~4 live (TM, B) f32 temporaries
        if resident + 2 * c * d * 4 + 4 * c * b * 4 <= budget_bytes:
            return c
    return divisors[-1]


def ntxent_loss_pallas(zis, zjs, temperature=0.5, alpha_weight=0.5,
                       norm=True, tile_m=None, matmul_in_bf16=False):
    assert zis.shape == zjs.shape and zis.ndim == 2
    # Kernel math is f32 throughout (matches the PyTorch module for f32 inputs);
    # the DMA'd h2 scratch is f32, so cast here.
    zis = zis.astype(jnp.float32)
    zjs = zjs.astype(jnp.float32)
    b, d = zis.shape
    if tile_m is None:
        tile_m = _pick_tile(b, d)
    assert b % tile_m == 0, (b, tile_m)
    grid = (b // tile_m,)

    # Static shift is exact & safe when rows are L2-normalized and exp(-2/T)
    # stays comfortably inside f32 range.
    static_shift = bool(norm) and (2.0 / float(temperature) <= 80.0)

    # VMEM footprint: h1 double buffer + single resident h2 + (1,B) stats
    # + ~4 live (TM,B) f32 temporaries.
    footprint = (2 * tile_m * d * 4 + b * d * 4 + b * 4 + 4 * tile_m * b * 4)
    vmem_limit = min(56 * 1024 * 1024, max(32 * 1024 * 1024,
                                           footprint + 8 * 1024 * 1024))
    assert b * d * 4 + 2 * tile_m * d * 4 <= 56 * 1024 * 1024, (
        "resident h2 too large for VMEM; this kernel needs 2-D column tiling "
        "for such sizes")

    kernel = functools.partial(
        _ntxent_kernel,
        temperature=float(temperature),
        alpha=float(alpha_weight),
        norm=bool(norm),
        static_shift=static_shift,
        batch=b,
        tile_m=tile_m,
        matmul_in_bf16=bool(matmul_in_bf16),
    )

    out = pl.pallas_call(
        kernel,
        out_shape=jax.ShapeDtypeStruct((1, 1), jnp.float32),
        grid=grid,
        in_specs=[
            # h1 row tile: auto-pipelined / double-buffered across the grid
            pl.BlockSpec((tile_m, d), lambda i: (i, 0)),
            # h2: left in HBM; manually DMA'd ONCE into a single VMEM scratch
            pl.BlockSpec(memory_space=pl.ANY),
        ],
        out_specs=pl.BlockSpec(memory_space=pltpu.MemorySpace.SMEM),
        scratch_shapes=[
            pltpu.VMEM((b, d), jnp.float32),     # the single (scaled) h2 copy
            pltpu.VMEM((1, b), jnp.float32),     # running column sum(exp)
            pltpu.SMEM((2,), jnp.float32),       # [sum(row_lse - diag), sum(diag)]
            pltpu.SMEM((1,), jnp.float32),       # running scalar shift (dynamic path)
            pltpu.SemaphoreType.DMA(()),         # h2 copy completion
        ],
        compiler_params=pltpu.CompilerParams(
            # Carried accumulators (online column LSE) -> reduction axis.
            dimension_semantics=("arbitrary",),
            vmem_limit_bytes=vmem_limit,
        ),
    )(zis, zjs)
    return out[0, 0]


def ntxent_loss_ref(zis, zjs, temperature=0.5, alpha_weight=0.5, norm=True):
    """Pure-JAX reference mirroring the PyTorch module."""
    def l2n(x):
        return x / jnp.maximum(jnp.linalg.norm(x, axis=1, keepdims=True), 1e-12)

    h1 = zis.astype(jnp.float32)
    h2 = zjs.astype(jnp.float32)
    if norm:
        h1, h2 = l2n(h1), l2n(h2)
    b = h1.shape[0]
    labels = jnp.eye(b, dtype=jnp.float32)
    logits_ab = (h1 @ h2.T) / temperature
    logits_ba = (h2 @ h1.T) / temperature

    def soft_xent(target, logits):
        return -(target * jax.nn.log_softmax(logits, axis=1)).sum() / logits.shape[0]

    return (alpha_weight * soft_xent(labels, logits_ab)
            + (1.0 - alpha_weight) * soft_xent(labels, logits_ba))


if __name__ == "__main__":
    key = jax.random.PRNGKey(0)
    k1, k2, k3, k4, k5, k6 = jax.random.split(key, 6)

    temperature = 0.5
    alpha_weight = 0.5

    # Test 1: module-sized toy shape (single tile, grid == 1), static-shift path.
    batch, hidden = 8, 32
    zis = jax.random.normal(k1, (batch, hidden), dtype=jnp.float32)
    zjs = jax.random.normal(k2, (batch, hidden), dtype=jnp.float32)
    loss = ntxent_loss_pallas(zis, zjs, temperature, alpha_weight)
    jax.block_until_ready(loss)
    ref = ntxent_loss_ref(zis, zjs, temperature, alpha_weight)
    assert jnp.allclose(loss, ref, atol=1e-5, rtol=1e-5), (loss, ref)

    # Test 2: multiple row tiles -> exercises the online column-LSE /
    # accumulator path (grid = 4).
    batch2, hidden2 = 64, 128
    zis2 = jax.random.normal(k3, (batch2, hidden2), dtype=jnp.float32)
    zjs2 = jax.random.normal(k4, (batch2, hidden2), dtype=jnp.float32)
    loss2 = ntxent_loss_pallas(zis2, zjs2, temperature, alpha_weight, tile_m=16)
    jax.block_until_ready(loss2)
    ref2 = ntxent_loss_ref(zis2, zjs2, temperature, alpha_weight)
    assert jnp.allclose(loss2, ref2, atol=1e-5, rtol=1e-5), (loss2, ref2)

    # Test 3: norm=False -> exercises the dynamic scalar-shift fallback path.
    batch3, hidden3 = 16, 32
    zis3 = jax.random.normal(k5, (batch3, hidden3), dtype=jnp.float32)
    zjs3 = jax.random.normal(k6, (batch3, hidden3), dtype=jnp.float32)
    loss3 = ntxent_loss_pallas(zis3, zjs3, temperature, alpha_weight,
                               norm=False, tile_m=8)
    jax.block_until_ready(loss3)
    ref3 = ntxent_loss_ref(zis3, zjs3, temperature, alpha_weight, norm=False)
    assert jnp.allclose(loss3, ref3, atol=1e-5, rtol=1e-5), (loss3, ref3)

    print("KERNEL_OK")
</pallas_src>

<mosaic_0001>
module attributes {stable_mosaic.version = 11 : i64} {
  func.func @_ntxent_kernel(%arg0: i32, %arg1: memref<8x32xf32, #tpu.memory_space<vmem>>, %arg2: memref<8x32xf32, #tpu.memory_space<any>>, %arg3: memref<1x1xf32, #tpu.memory_space<smem>>, %arg4: memref<8x32xf32, #tpu.memory_space<vmem>>, %arg5: memref<1x8xf32, #tpu.memory_space<vmem>>, %arg6: memref<2xf32, #tpu.memory_space<smem>>, %arg7: memref<1xf32, #tpu.memory_space<smem>>, %arg8: memref<!tpu.dma_semaphore, #tpu.memory_space<semaphore_mem>>) attributes {dimension_semantics = [#tpu.dimension_semantics<arbitrary>], iteration_bounds = array<i64: 1>, scalar_prefetch = 0 : i64, scratch_operands = 5 : i64, tpu.core_type = #tpu.core_type<tc>, window_params = [{transform_indices = @transform_0, window_bounds = array<i64: 8, 32>}, {}, {transform_indices = @transform_2, window_bounds = array<i64: 1, 1>}]} {
    %c0_i32 = arith.constant 0 : i32
    %0 = arith.cmpi eq, %arg0, %c0_i32 : i32
    %1 = arith.extui %0 : i1 to i32
    %c0_i32_0 = arith.constant 0 : i32
    %2 = arith.cmpi ne, %1, %c0_i32_0 : i32
    scf.if %2 {
      tpu.enqueue_dma source(%arg2 : memref<8x32xf32, #tpu.memory_space<any>>) target(%arg4 : memref<8x32xf32, #tpu.memory_space<vmem>>) target_semaphore(%arg8 : memref<!tpu.dma_semaphore, #tpu.memory_space<semaphore_mem>>)
      tpu.wait_dma2 semaphore(%arg8 : memref<!tpu.dma_semaphore, #tpu.memory_space<semaphore_mem>>) src(%arg2 : memref<8x32xf32, #tpu.memory_space<any>>) dst(%arg4 : memref<8x32xf32, #tpu.memory_space<vmem>>)
      %c0_25 = arith.constant 0 : index
      %c0_26 = arith.constant 0 : index
      %57 = vector.load %arg4[%c0_25, %c0_26] : memref<8x32xf32, #tpu.memory_space<vmem>>, vector<8x32xf32>
      %58 = arith.mulf %57, %57 : vector<8x32xf32>
      %cst_27 = arith.constant dense<0.000000e+00> : vector<8xf32>
      %59 = vector.multi_reduction <add>, %58, %cst_27 [1] : vector<8x32xf32> to vector<8xf32>
      %60 = vector.shape_cast %59 : vector<8xf32> to vector<8x1xf32>
      %cst_28 = arith.constant 1.000000e-24 : f32
      %61 = vector.broadcast %cst_28 : f32 to vector<8x1xf32>
      %62 = arith.maximumf %60, %61 : vector<8x1xf32>
      %63 = math.rsqrt %62 : vector<8x1xf32>
      %64 = vector.broadcast %63 : vector<8x1xf32> to vector<8x32xf32>
      %65 = arith.mulf %57, %64 : vector<8x32xf32>
      %c0_29 = arith.constant 0 : index
      %c0_30 = arith.constant 0 : index
      %66 = vector.load %arg4[%c0_29, %c0_30] : memref<8x32xf32, #tpu.memory_space<vmem>>, vector<8x32xf32>
      tpu.vector_store %arg4[%c0_29, %c0_30], %65 {strides = array<i32>} : memref<8x32xf32, #tpu.memory_space<vmem>>, vector<8x32xf32>,
      %cst_31 = arith.constant 0.000000e+00 : f32
      %67 = vector.broadcast %cst_31 : f32 to vector<1x8xf32>
      %c0_32 = arith.constant 0 : index
      %c0_33 = arith.constant 0 : index
      %68 = vector.load %arg5[%c0_32, %c0_33] : memref<1x8xf32, #tpu.memory_space<vmem>>, vector<1x8xf32>
      tpu.vector_store %arg5[%c0_32, %c0_33], %67 {strides = array<i32>} : memref<1x8xf32, #tpu.memory_space<vmem>>, vector<1x8xf32>,
      %cst_34 = arith.constant 0.000000e+00 : f32
      %c0_35 = arith.constant 0 : index
      %69 = memref.load %arg6[%c0_35] : memref<2xf32, #tpu.memory_space<smem>>
      memref.store %cst_34, %arg6[%c0_35] : memref<2xf32, #tpu.memory_space<smem>>
      %cst_36 = arith.constant 0.000000e+00 : f32
      %c1_37 = arith.constant 1 : index
      %70 = memref.load %arg6[%c1_37] : memref<2xf32, #tpu.memory_space<smem>>
      memref.store %cst_36, %arg6[%c1_37] : memref<2xf32, #tpu.memory_space<smem>>
    } else {
    }
    %c0 = arith.constant 0 : index
    %c0_1 = arith.constant 0 : index
    %3 = vector.load %arg1[%c0, %c0_1] : memref<8x32xf32, #tpu.memory_space<vmem>>, vector<8x32xf32>
    %4 = arith.mulf %3, %3 : vector<8x32xf32>
    %cst = arith.constant dense<0.000000e+00> : vector<8xf32>
    %5 = vector.multi_reduction <add>, %4, %cst [1] : vector<8x32xf32> to vector<8xf32>
    %6 = vector.shape_cast %5 : vector<8xf32> to vector<8x1xf32>
    %cst_2 = arith.constant 1.000000e-24 : f32
    %7 = vector.broadcast %cst_2 : f32 to vector<8x1xf32>
    %8 = arith.maximumf %6, %7 : vector<8x1xf32>
    %9 = math.rsqrt %8 : vector<8x1xf32>
    %cst_3 = arith.constant 2.000000e+00 : f32
    %10 = vector.broadcast %cst_3 : f32 to vector<8x1xf32>
    %11 = arith.mulf %9, %10 : vector<8x1xf32>
    %12 = vector.broadcast %11 : vector<8x1xf32> to vector<8x32xf32>
    %13 = arith.mulf %3, %12 : vector<8x32xf32>
    %c0_4 = arith.constant 0 : index
    %c0_5 = arith.constant 0 : index
    %14 = vector.load %arg4[%c0_4, %c0_5] : memref<8x32xf32, #tpu.memory_space<vmem>>, vector<8x32xf32>
    %cst_6 = arith.constant dense<0.000000e+00> : vector<8x8xf32>
    %15 = tpu.matmul %13, %14, %cst_6 {dimension_numbers = #tpu.dot_dimension_numbers<[1], [1], [0], [0], [0, 0, 1, 0], [], []>} : vector<8x32xf32>, vector<8x32xf32>, vector<8x8xf32> -> vector<8x8xf32>
    %c8_i32 = arith.constant 8 : i32
    %16 = arith.muli %arg0, %c8_i32 : i32
    %17 = tpu.iota {dimensions = array<i32: 0>} : vector<8x8xi32>
    %18 = tpu.iota {dimensions = array<i32: 1>} : vector<8x8xi32>
    %19 = vector.broadcast %16 : i32 to vector<8x8xi32>
    %20 = arith.addi %17, %19 : vector<8x8xi32>
    %21 = arith.cmpi eq, %18, %20 : vector<8x8xi32>
    %cst_7 = arith.constant 0.000000e+00 : f32
    %22 = vector.broadcast %cst_7 : f32 to vector<8x8xf32>
    %23 = arith.select %21, %15, %22 : vector<8x8xi1>, vector<8x8xf32>
    %cst_8 = arith.constant dense<0.000000e+00> : vector<8xf32>
    %24 = vector.multi_reduction <add>, %23, %cst_8 [1] : vector<8x8xf32> to vector<8xf32>
    %25 = vector.shape_cast %24 : vector<8xf32> to vector<8x1xf32>
    %cst_9 = arith.constant 2.000000e+00 : f32
    %26 = vector.broadcast %cst_9 : f32 to vector<8x8xf32>
    %27 = arith.subf %15, %26 : vector<8x8xf32>
    %28 = math.exp %27 : vector<8x8xf32>
    %cst_10 = arith.constant dense<0.000000e+00> : vector<8xf32>
    %29 = vector.multi_reduction <add>, %28, %cst_10 [1] : vector<8x8xf32> to vector<8xf32>
    %30 = vector.shape_cast %29 : vector<8xf32> to vector<8x1xf32>
    %c0_11 = arith.constant 0 : index
    %31 = memref.load %arg6[%c0_11] : memref<2xf32, #tpu.memory_space<smem>>
    %32 = math.log %30 : vector<8x1xf32>
    %cst_12 = arith.constant 2.000000e+00 : f32
    %33 = vector.broadcast %cst_12 : f32 to vector<8x1xf32>
    %34 = arith.addf %33, %32 : vector<8x1xf32>
    %35 = arith.subf %34, %25 : vector<8x1xf32>
    %36 = vector.shape_cast %35 : vector<8x1xf32> to vector<1x8x1xf32>
    %cst_13 = arith.constant dense<0.000000e+00> : vector<1xf32>
    %37 = vector.multi_reduction <add>, %36, %cst_13 [1, 2] : vector<1x8x1xf32> to vector<1xf32>
    %38 = vector.shape_cast %37 : vector<1xf32> to vector<1x1x1xf32>
    %39 = vector.extract %38[0, 0, 0] : f32 from vector<1x1x1xf32>
    %40 = arith.addf %31, %39 : f32
    %c0_14 = arith.constant 0 : index
    %41 = memref.load %arg6[%c0_14] : memref<2xf32, #tpu.memory_space<smem>>
    memref.store %40, %arg6[%c0_14] : memref<2xf32, #tpu.memory_space<smem>>
    %c1 = arith.constant 1 : index
    %42 = memref.load %arg6[%c1] : memref<2xf32, #tpu.memory_space<smem>>
    %43 = vector.shape_cast %25 : vector<8x1xf32> to vector<1x8x1xf32>
    %cst_15 = arith.constant dense<0.000000e+00> : vector<1xf32>
    %44 = vector.multi_reduction <add>, %43, %cst_15 [1, 2] : vector<1x8x1xf32> to vector<1xf32>
    %45 = vector.shape_cast %44 : vector<1xf32> to vector<1x1x1xf32>
    %46 = vector.extract %45[0, 0, 0] : f32 from vector<1x1x1xf32>
    %47 = arith.addf %42, %46 : f32
    %c1_16 = arith.constant 1 : index
    %48 = memref.load %arg6[%c1_16] : memref<2xf32, #tpu.memory_space<smem>>
    memref.store %47, %arg6[%c1_16] : memref<2xf32, #tpu.memory_space<smem>>
    %cst_17 = arith.constant dense<0.000000e+00> : vector<8xf32>
    %49 = vector.multi_reduction <add>, %28, %cst_17 [0] : vector<8x8xf32> to vector<8xf32>
    %50 = vector.shape_cast %49 : vector<8xf32> to vector<1x8xf32>
    %c0_18 = arith.constant 0 : index
    %c0_19 = arith.constant 0 : index
    %51 = vector.load %arg5[%c0_18, %c0_19] : memref<1x8xf32, #tpu.memory_space<vmem>>, vector<1x8xf32>
    %52 = arith.addf %51, %50 : vector<1x8xf32>
    %c0_20 = arith.constant 0 : index
    %c0_21 = arith.constant 0 : index
    %53 = vector.load %arg5[%c0_20, %c0_21] : memref<1x8xf32, #tpu.memory_space<vmem>>, vector<1x8xf32>
    tpu.vector_store %arg5[%c0_20, %c0_21], %52 {strides = array<i32>} : memref<1x8xf32, #tpu.memory_space<vmem>>, vector<1x8xf32>,
    %c0_i32_22 = arith.constant 0 : i32
    %54 = arith.cmpi eq, %arg0, %c0_i32_22 : i32
    %55 = arith.extui %54 : i1 to i32
    %cst_23 = arith.constant 2.000000e+00 : f32
    %c0_i32_24 = arith.constant 0 : i32
    %56 = arith.cmpi ne, %55, %c0_i32_24 : i32
    scf.if %56 {
      %c0_25 = arith.constant 0 : index
      %c0_26 = arith.constant 0 : index
      %57 = vector.load %arg5[%c0_25, %c0_26] : memref<1x8xf32, #tpu.memory_space<vmem>>, vector<1x8xf32>
      %58 = math.log %57 : vector<1x8xf32>
      %59 = vector.broadcast %cst_23 : f32 to vector<1x8xf32>
      %60 = arith.addf %59, %58 : vector<1x8xf32>
      %61 = vector.shape_cast %60 : vector<1x8xf32> to vector<1x1x8xf32>
      %cst_27 = arith.constant dense<0.000000e+00> : vector<1xf32>
      %62 = vector.multi_reduction <add>, %61, %cst_27 [1, 2] : vector<1x1x8xf32> to vector<1xf32>
      %63 = vector.shape_cast %62 : vector<1xf32> to vector<1x1x1xf32>
      %64 = vector.extract %63[0, 0, 0] : f32 from vector<1x1x1xf32>
      %c0_28 = arith.constant 0 : index
      %65 = memref.load %arg6[%c0_28] : memref<2xf32, #tpu.memory_space<smem>>
      %cst_29 = arith.constant 1.250000e-01 : f32
      %66 = arith.mulf %65, %cst_29 : f32
      %c1_30 = arith.constant 1 : index
      %67 = memref.load %arg6[%c1_30] : memref<2xf32, #tpu.memory_space<smem>>
      %68 = arith.subf %64, %67 : f32
      %cst_31 = arith.constant 1.250000e-01 : f32
      %69 = arith.mulf %68, %cst_31 : f32
      %cst_32 = arith.constant 5.000000e-01 : f32
      %70 = arith.mulf %cst_32, %66 : f32
      %cst_33 = arith.constant 5.000000e-01 : f32
      %71 = arith.mulf %cst_33, %69 : f32
      %72 = arith.addf %70, %71 : f32
      %c0_34 = arith.constant 0 : index
      %c0_35 = arith.constant 0 : index
      %73 = memref.load %arg3[%c0_34, %c0_35] : memref<1x1xf32, #tpu.memory_space<smem>>
      memref.store %72, %arg3[%c0_34, %c0_35] : memref<1x1xf32, #tpu.memory_space<smem>>
    } else {
    }
    return
  }
  func.func @transform_0(%arg0: i32) -> (i32, i32) {
    %c0_i32 = arith.constant 0 : i32
    %c0_i32_0 = arith.constant 0 : i32
    return %arg0, %c0_i32 : i32, i32
  }
  func.func @transform_2(%arg0: i32) -> (i32, i32) {
    %c0_i32 = arith.constant 0 : i32
    %c0_i32_0 = arith.constant 0 : i32
    %c0_i32_1 = arith.constant 0 : i32
    return %c0_i32, %c0_i32_0 : i32, i32
  }
}

</mosaic_0001>

<llo_original>
// kernel: tpu_custom_call.1
$region0: #{tpu_custom_call.1}
  #allocation0 [shape = 'u32[]', space=smem, size = 0x4, offset = 0x4, fixed_abs, tag = 'smem constant byte address 0x4 - core index']
  #allocation1 [shape = 'u32[72,128]{1,0:T(1,128)}', space=vmem, size = 0x9000, scoped, tag = 'internal scratch']
  #allocation2 [shape = 'f32[8,32]{1,0:T(8,128)}', space=vmem, size = 0x1000, scoped, tag = 'scratch operand']
  #allocation3 [shape = 'f32[1,8]{1,0:T(1,128)}', space=vmem, size = 0x200, scoped, tag = 'scratch operand']
  #allocation4 [shape = 'f32[2]{0:T(128)}', space=smem, size = 0x200, scoped, tag = 'scratch operand']
  #allocation5 [shape = 'f32[1]{0:T(128)}', space=smem, size = 0x200, scoped, tag = 'scratch operand']
  #allocation6 [shape = 's32[1]{0}', space=sflag, size = 0x4, scoped, tag = 'scratch operand']
  #allocation11 [shape = 's32[]', space=sflag, size = 0x4, offset = 0, fixed_abs, tag = 'sflag constant byte address 0x0 - dummy sync flag']
  #allocation12 [shape = 's32[]', space=sflag, size = 0x4, offset = 0, fixed_abs, tag = 'sflag constant byte address 0x0 - dummy sync flag']
  #allocation13 [shape = 'u32[]', space=smem, size = 0x4, offset = 0x44, fixed_abs, tag = 'smem constant byte address 0x44 - assertion arg 0']
  #allocation14 [shape = 'u32[]', space=smem, size = 0x4, offset = 0x48, fixed_abs, tag = 'smem constant byte address 0x48 - assertion arg 1']
  %s0 = inlined_call_operand.hbm [shape: f32[8,32], index: 0, kind: input, shape index: {}]
  %s1 = inlined_call_operand.hbm [shape: f32[8,32], index: 1, kind: input, shape index: {}]
  %s2 = inlined_call_operand.hbm [shape: f32[1,1], index: 2, kind: output, shape index: {}]
  %s3 = sld [smem:[#allocation0]]
  $region30: #{tpu_custom_call.1} parent=0
    _
  %s5 = ssub.s32 1, %s3
  %s6 = scalar_select 0, %s5, %s3
  $region1: #{tpu_custom_call.1} parent=0
    #allocation7 [shape = 'u8[4096]{0}', space=vmem, size = 0x1000, scoped, tag = 'input window, operand 0, single buffered']
    #allocation8 [shape = 's32[1]{0}', space=sflag, size = 0x4, scoped, tag = 'scoped memory for tpu_custom_call.1']
    #allocation9 [shape = 's32[1]{0}', space=sflag, size = 0x4, scoped, tag = 'scoped memory for tpu_custom_call.1']
    #allocation10 [shape = 'u8[512]{0}', space=smem, size = 0x200, scoped, tag = 'output window, operand 0, single buffered']
    %7 = vsyncpa [#allocation8], 0
    %8 = vsyncpa [#allocation9], 0
    // Predicated region
    $region2: #{tpu_custom_call.1} parent=1 // pred_check
      _
    $region3: #{tpu_custom_call.1} parent=1 // pred_check_branch
      %10 = sbr.rel (0) target = $region5
    $region4: #{tpu_custom_call.1} parent=1 // pred_region
      %12 = vsyncadd [#allocation8], 0
      %s14 = sshll.u32 %s0, 4
      %s15 = int_to_ptr.hbm [resolvable:$true] %s14
      %s16 = sshll.u32 [#allocation7], 4
      %s17 = int_to_ptr.vmem [resolvable:$true] %s16
      %19 = dma.hbm_to_vmem [thread:$0]  %s15, 128, %s17, [#allocation8]
    $region5: #{tpu_custom_call.1} parent=1 // pred_fallthru
      _
    // Predicated region
    $region6: #{tpu_custom_call.1} parent=1 // pred_check
      _
    $region7: #{tpu_custom_call.1} parent=1 // pred_check_branch
      %21 = sbr.rel (0) target = $region9
    $region8: #{tpu_custom_call.1} parent=1 // pred_region
      %23 = dma.done [#allocation8], 128
    $region9: #{tpu_custom_call.1} parent=1 // pred_fallthru
      _
    %p24 = scmp.eq.s32.totalorder 0, 0
    // Predicated region
    $region10: #{tpu_custom_call.1} parent=1 // pred_check
      %p25 = pneg %p24
    $region11: #{tpu_custom_call.1} parent=1 // pred_check_branch
      %27 = sbr.rel (%p25) target = $region13
    $region12: #{tpu_custom_call.1} parent=1 // pred_region
      // Predicated region
      $region14: #{tpu_custom_call.1} parent=12 // pred_check
        _
      $region15: #{tpu_custom_call.1} parent=12 // pred_check_branch
        %29 = sbr.rel target = $region17
      $region16: #{tpu_custom_call.1} parent=12 // pred_region
        %30 = sst [smem:[#allocation13]] [#allocation12]
        %31 = sst [smem:[#allocation14]] [#allocation11]
      $region17: #{tpu_custom_call.1} parent=12 // pred_fallthru
        _
      %33 = shalt.err (0)
      %s35 = sshll.u32 %s1, 4
      %s36 = int_to_ptr.hbm [resolvable:$true] %s35
      %s37 = sshll.u32 [#allocation2], 4
      %s38 = int_to_ptr.vmem [resolvable:$true] %s37
      %40 = dma.hbm_to_vmem [thread:$0]  %s36, 128, %s38, [#allocation6]
      %s41 = smul.u32 8, 1
      %s42 = sshll.u32 %s41, 4
      %43 = dma.done [#allocation6], %s42
      %v44 = vld [vmem:[#allocation2] sm:$0xff]
      %v45 = vmul.f32 %v44, %v44
      %vm46 = vcmask 261120
      %v47 = vsel %vm46, %v45, 0.0
      %48 = vadd.xlane.f32.xlu0 %v47
      %v49 = vpop.xlane.xlu0 %48
      %v50 = vmax.f32 %v49, 1e-24
      %v51 = vrsqrt.pop %v50
      %v52 = vmul.f32 %v51, %v50
      %v53 = vmul.f32 %v52, %v51
      %v54 = vmul.f32 0.5, %v53
      %v55 = vsub.f32 1.5, %v54
      %v56 = vmul.f32 %v51, %v55
      %vm57 = vweird.f32 %v50
      %vm58 = vweird.f32 %v51
      %vm59 = vmor %vm57, %vm58
      %v60 = vsel %vm59, %v51, %v56
      %v61 = vmul.f32 %v44, %v60
      %62 = vst.msk [vmem:[#allocation2] sm:$0xff] %vm46, %v61
      %vm63 = vcmask 57344
      %64 = vst.msk [vmem:[#allocation3] sm:$0x1] %vm63, 0.0
      %s65 = scalar_lea.smem [#allocation4], 0
      %66 = sst [smem:[%s65]] 0.0
      %s67 = scalar_lea.smem [#allocation4], 1
      %68 = sst [smem:[%s67]] 0.0
    $region13: #{tpu_custom_call.1} parent=1 // pred_fallthru
      _
    %v69 = vld [vmem:[#allocation7] sm:$0xff]
    %v70 = vmul.f32 %v69, %v69
    %vm71 = vcmask 261120
    %v72 = vsel %vm71, %v70, 0.0
    %73 = vadd.xlane.f32.xlu0 %v72
    %v74 = vpop.xlane.xlu0 %73
    %v75 = vmax.f32 %v74, 1e-24
    %v76 = vrsqrt.pop %v75
    %v77 = vmul.f32 %v76, %v75
    %v78 = vmul.f32 %v77, %v76
    %v79 = vmul.f32 0.5, %v78
    %v80 = vsub.f32 1.5, %v79
    %v81 = vmul.f32 %v76, %v80
    %vm82 = vweird.f32 %v75
    %vm83 = vweird.f32 %v76
    %vm84 = vmor %vm82, %vm83
    %v85 = vsel %vm84, %v76, %v81
    %v86 = vmul.f32 %v85, 2.0
    %v87 = vmul.f32 %v69, %v86
    %v88 = vld [vmem:[#allocation2] sm:$0xff]
    %v90 = vsel %vm71, %v87, 0
    %v93 = vsel %vm71, %v88, 0
    %95 = vmatpush.xpose.msra.mxu0 0.0
    %96 = vmatpush.xpose.msra.mxu0 0.0
    %97 = vmatpush.xpose.msra.mxu0 0.0
    %98 = vmatpush.xpose.msra.mxu0 0.0
    %99 = vmatpush.xpose.msra.mxu0 0.0
    %100 = vmatpush.xpose.msra.mxu0 0.0
    %101 = vmatpush.xpose.msra.mxu0 0.0
    %102 = vmatpush.xpose.msra.mxu0 0.0
    %103 = vmatpush.xpose.msra.mxu0 0.0
    %104 = vmatpush.xpose.msra.mxu0 0.0
    %105 = vmatpush.xpose.msra.mxu0 0.0
    %106 = vmatpush.xpose.msra.mxu0 0.0
    %107 = vmatpush.xpose.msra.mxu0 0.0
    %108 = vmatpush.xpose.msra.mxu0 0.0
    %109 = vmatpush.xpose.msra.mxu0 0.0
    %110 = vmatpush.xpose.msra.mxu0 %v93
    %111 = vmatmul.f32.gmra.mxu0 %v90
    %v112 = vpop.f32.mrf.mxu0
    %v113 = vadd.f32 0.0, %v112
    %114 = vdwg.mxu0
    %s115 = smul.u32 0, 8
    %v116 = vlaneseq
    %v117 = vshrl.u32 %v116, 7
    %v118 = vlaneseq
    %v119 = vand.u32 %v118, 127
    %v120 = vstv %s115
    %v121 = vadd.s32 %v117, %v120
    %vm122 = vcmp.eq.s32.totalorder %v119, %v121
    %v123 = vsel %vm122, %v113, 0.0
    %vm124 = vcmask 64512
    %v125 = vsel %vm124, %v123, 0.0
    %126 = vadd.xlane.f32.xlu0 %v125
    %v127 = vpop.xlane.xlu0 %126
    %v128 = vsub.f32 %v113, 2.0
    %v129 = vmul.f32 %v128, 1.442695
    %v130 = vpow.pop %v129
    %v131 = vsel %vm124, %v130, 0.0
    %132 = vadd.xlane.f32.xlu0 %v131
    %v133 = vpop.xlane.xlu0 %132
    %s134 = sld [smem:[#allocation4]]
    %v135 = vlog2.pop %v133
    %v136 = vmul.f32 %v135, 0.6931472
    %v137 = vadd.f32 %v136, 2.0
    %v138 = vsub.f32 %v137, %v127
    %vm139 = vcmask 7168
    %v140 = vsel %vm139, %v138, 0.0
    %141 = vadd.xlane.f32.xlu0 %v140
    %v142 = vpop.xlane.xlu0 %141
    %v143 = vrot.slane %v142, 4
    %v144 = vadd.f32 %v142, %v143
    %v145 = vrot.slane %v144, 2
    %v146 = vadd.f32 %v144, %v145
    %v147 = vrot.slane %v146, 1
    %v148 = vadd.f32 %v146, %v147
    %s149 = vtos %v148
    %s150 = sadd.f32 %s134, %s149
    %s151 = scalar_lea.smem [#allocation4], 0
    %152 = sst [smem:[%s151]] %s150
    %s153 = sld [smem:[#allocation4 + $0x1]]
    %v154 = vsel %vm139, %v127, 0.0
    %155 = vadd.xlane.f32.xlu0 %v154
    %v156 = vpop.xlane.xlu0 %155
    %v157 = vrot.slane %v156, 4
    %v158 = vadd.f32 %v156, %v157
    %v159 = vrot.slane %v158, 2
    %v160 = vadd.f32 %v158, %v159
    %v161 = vrot.slane %v160, 1
    %v162 = vadd.f32 %v160, %v161
    %s163 = vtos %v162
    %s164 = sadd.f32 %s153, %s163
    %s165 = scalar_lea.smem [#allocation4], 1
    %166 = sst [smem:[%s165]] %s164
    %v167 = vrot.slane %v131, 4
    %v168 = vadd.f32 %v131, %v167
    %v169 = vrot.slane %v168, 2
    %v170 = vadd.f32 %v168, %v169
    %v171 = vrot.slane %v170, 1
    %v172 = vadd.f32 %v170, %v171
    %v173 = vld [vmem:[#allocation3] sm:$0x1]
    %v174 = vadd.f32 %v173, %v172
    %vm175 = vcmask 57344
    %176 = vst.msk [vmem:[#allocation3] sm:$0x1] %vm175, %v174
    // Predicated region
    $region18: #{tpu_custom_call.1} parent=1 // pred_check
      %p177 = pneg %p24
    $region19: #{tpu_custom_call.1} parent=1 // pred_check_branch
      %179 = sbr.rel (%p177) target = $region21
    $region20: #{tpu_custom_call.1} parent=1 // pred_region
      %v180 = vld [vmem:[#allocation3] sm:$0x1]
      %v181 = vlog2.pop %v180
      %v182 = vmul.f32 %v181, 0.6931472
      %v183 = vadd.f32 %v182, 2.0
      %v184 = vsel %vm175, %v183, 0.0
      %185 = vadd.xlane.f32.xlu0 %v184
      %v186 = vpop.xlane.xlu0 %185
      %v187 = vrot.slane %v186, 4
      %v188 = vadd.f32 %v186, %v187
      %v189 = vrot.slane %v188, 2
      %v190 = vadd.f32 %v188, %v189
      %v191 = vrot.slane %v190, 1
      %v192 = vadd.f32 %v190, %v191
      %s193 = vtos %v192
      %s194 = sld [smem:[#allocation4]]
      %s195 = smul.f32 %s194, 0.125
      %s196 = sld [smem:[#allocation4 + $0x1]]
      %s197 = ssub.f32 %s193, %s196
      %s198 = smul.f32 %s197, 0.125
      %s199 = smul.f32 %s195, 0.5
      %s200 = smul.f32 %s198, 0.5
      %s201 = sadd.f32 %s199, %s200
      %s202 = scalar_lea.smem [#allocation10], 0
      %203 = sst [smem:[%s202]] %s201
    $region21: #{tpu_custom_call.1} parent=1 // pred_fallthru
      _
    // Predicated region
    $region22: #{tpu_custom_call.1} parent=1 // pred_check
      _
    $region23: #{tpu_custom_call.1} parent=1 // pred_check_branch
      %205 = sbr.rel (0) target = $region25
    $region24: #{tpu_custom_call.1} parent=1 // pred_region
      %207 = vsyncadd [#allocation9], 0
      %s209 = sshll.u32 %s2, 4
      %s210 = int_to_ptr.hbm [resolvable:$true] %s209
      %212 = dma.smem_to_hbm [#allocation10], 16, %s210, [#allocation9]
    $region25: #{tpu_custom_call.1} parent=1 // pred_fallthru
      _
    // Predicated region
    $region26: #{tpu_custom_call.1} parent=1 // pred_check
      _
    $region27: #{tpu_custom_call.1} parent=1 // pred_check_branch
      %214 = sbr.rel (0) target = $region29
    $region28: #{tpu_custom_call.1} parent=1 // pred_region
      %216 = dma.done [#allocation9], 16
    $region29: #{tpu_custom_call.1} parent=1 // pred_fallthru
      _
    %217 = sfence
    %218 = vsyncpa [#allocation8], 1
    %219 = vsyncpa [#allocation9], 1
  %220 = vsyncmov [#allocation6]
  %s221 = vpop.sfrf %220
  %p222 = scmp.eq.s32.totalorder %s221, 0
  %p223 = pneg %p222
  %225 = shalt.err (%p223)

</llo_original>
